<compile_context>
chip_gen: v6e
topology: v6e:2x2x1
jax: 0.10.0
libtpu: 0.0.40
codegen_flags: <defaults>
</compile_context>

<pallas_src>
import jax
import jax.numpy as jnp
from jax import lax
from jax.experimental import pallas as pl
from jax.experimental.pallas import tpu as pltpu

D_IN, H1, H2, D_OUT = 14, 10, 10, 1
_LANE = 128  # lanes per vreg; batch tiles are multiples of this


def _round_up(n, m):
    return ((n + m - 1) // m) * m


def _mlp_kernel(x_ref, w1_ref, b1_ref, w2_ref, b2_ref, w3_ref, b3_ref, o_ref):
    # x block arrives in its natural (TB, D_IN) layout.  Contract D_IN of both
    # operands (flash-attention-style q@k^T dimension numbers) so the result -- and
    # every later activation -- is lane-dense with the batch tile on the lane axis.
    x = x_ref[...]                                                       # (TB, D_IN) f32
    h1 = lax.dot_general(
        w1_ref[...], x,
        dimension_numbers=(((1,), (1,)), ((), ())),
        preferred_element_type=jnp.float32) + b1_ref[...]               # (H1, TB)
    h1 = jnp.maximum(h1, 0.0)                                            # ReLU
    h2 = jnp.dot(w2_ref[...], h1, preferred_element_type=jnp.float32) + b2_ref[...]
    h2 = jnp.maximum(h2, 0.0)                                            # (H2, TB)
    out = jnp.dot(w3_ref[...], h2, preferred_element_type=jnp.float32) + b3_ref[...]
    o_ref[...] = out.astype(o_ref.dtype)                                 # (1, TB) lane-dense store


def critic_net_forward(x, params, *, block_b=16384):
    """criticNet forward: x (B, 14) -> (B, 1) float32, one Pallas call."""
    w1, b1, w2, b2, w3, b3 = params
    x = x.astype(jnp.float32)        # mirrors x.to(torch.float32); no-op if already f32
    B = x.shape[0]

    # Batch tile: multiple of 128 lanes, large enough to amortize per-grid-step
    # overhead, but no larger than ceil(B/2) rounded up so the grid has >= 2 steps
    # whenever B > 128 (lets dimension_semantics="parallel" use both v7x cores).
    tb_cap = _round_up(block_b, _LANE)
    half_b = _round_up(pl.cdiv(B, 2), _LANE)
    tb = max(_LANE, min(tb_cap, half_b))
    grid_n = pl.cdiv(B, tb)
    b_pad = grid_n * tb

    def resident(shape):
        # Tiny weight/bias block stays VMEM-resident across all grid steps.
        return pl.BlockSpec(shape, lambda i: (0, 0))

    flops = 2 * b_pad * (D_IN * H1 + H1 * H2 + H2 * D_OUT)
    param_bytes = 4 * (D_IN * H1 + H1 + H1 * H2 + H2 + H2 * D_OUT + D_OUT)
    bytes_accessed = 4 * b_pad * (D_IN + D_OUT) + param_bytes

    # Scoped-VMEM limit: x buffers (tb,14 -> lanes pad to 128 => tb*512 B, x2 for
    # double buffering) + in-kernel values + out buffers fit comfortably at the
    # default tile; 48 MiB clears v5e's 16 MiB default and stays under v7x's 64 MiB.
    vmem_limit = 48 << 20

    out_t = pl.pallas_call(
        _mlp_kernel,
        out_shape=jax.ShapeDtypeStruct((D_OUT, b_pad), jnp.float32),
        grid=(grid_n,),
        in_specs=[
            pl.BlockSpec((tb, D_IN), lambda i: (i, 0)),   # contiguous tb*56 B HBM read
            resident((H1, D_IN)),
            resident((H1, 1)),
            resident((H2, H1)),
            resident((H2, 1)),
            resident((D_OUT, H2)),
            resident((D_OUT, 1)),
        ],
        out_specs=pl.BlockSpec((D_OUT, tb), lambda i: (0, i)),
        compiler_params=pltpu.CompilerParams(
            dimension_semantics=("parallel",),            # shard batch tiles across v7x TCs
            vmem_limit_bytes=vmem_limit,
        ),
        cost_estimate=pl.CostEstimate(
            flops=flops, transcendentals=0, bytes_accessed=bytes_accessed),
    )(x, w1, b1, w2, b2, w3, b3)

    # (1, b_pad) -> (B, 1): row-major (1, B) and (B, 1) are byte-identical, so this
    # never materializes a transpose; only the padded tail columns are dropped.
    return out_t[0, :B].reshape(B, 1)


def init_params(key):
    """Mirror torch.nn.Linear init U(-1/sqrt(fan_in), 1/sqrt(fan_in)).
    Weights stored (out_features, in_features), biases (out_features, 1)."""

    def linear_init(k, fan_in, fan_out):
        kw, kb = jax.random.split(k)
        bound = 1.0 / jnp.sqrt(jnp.float32(fan_in))
        w = jax.random.uniform(kw, (fan_out, fan_in), jnp.float32, -bound, bound)
        b = jax.random.uniform(kb, (fan_out, 1), jnp.float32, -bound, bound)
        return w, b

    k1, k2, k3 = jax.random.split(key, 3)
    w1, b1 = linear_init(k1, D_IN, H1)
    w2, b2 = linear_init(k2, H1, H2)
    w3, b3 = linear_init(k3, H2, D_OUT)
    return (w1, b1, w2, b2, w3, b3)


def reference_forward(x, params):
    w1, b1, w2, b2, w3, b3 = params
    x = x.astype(jnp.float32)
    h = jnp.maximum(x @ w1.T + b1.T, 0.0)
    h = jnp.maximum(h @ w2.T + b2.T, 0.0)
    return h @ w3.T + b3.T


if __name__ == "__main__":
    key = jax.random.PRNGKey(0)
    k_params, k_x = jax.random.split(key)

    params = init_params(k_params)
    # Small but non-trivial batch: exercises two grid steps plus a ragged final tile.
    batch = 200
    x = jax.random.normal(k_x, (batch, D_IN), jnp.float32)

    out = critic_net_forward(x, params)
    jax.block_until_ready(out)

    ref = reference_forward(x, params)
    assert out.shape == (batch, D_OUT), out.shape
    assert jnp.allclose(out, ref, atol=1e-5, rtol=1e-5)

    print("KERNEL_OK")
</pallas_src>

<mosaic_0001>
module attributes {stable_mosaic.version = 11 : i64} {
  func.func @_mlp_kernel(%arg0: i32, %arg1: memref<128x14xf32, #tpu.memory_space<vmem>>, %arg2: memref<10x14xf32, #tpu.memory_space<vmem>>, %arg3: memref<10x1xf32, #tpu.memory_space<vmem>>, %arg4: memref<10x10xf32, #tpu.memory_space<vmem>>, %arg5: memref<10x1xf32, #tpu.memory_space<vmem>>, %arg6: memref<1x10xf32, #tpu.memory_space<vmem>>, %arg7: memref<1x1xf32, #tpu.memory_space<vmem>>, %arg8: memref<1x128xf32, #tpu.memory_space<vmem>>) attributes {dimension_semantics = [#tpu.dimension_semantics<parallel>], iteration_bounds = array<i64: 2>, scalar_prefetch = 0 : i64, scratch_operands = 0 : i64, tpu.core_type = #tpu.core_type<tc>, window_params = [{transform_indices = @transform_0, window_bounds = array<i64: 128, 14>}, {pipeline_mode = #tpu.pipeline_mode<synchronous>, transform_indices = @transform_1, window_bounds = array<i64: 10, 14>}, {pipeline_mode = #tpu.pipeline_mode<synchronous>, transform_indices = @transform_2, window_bounds = array<i64: 10, 1>}, {pipeline_mode = #tpu.pipeline_mode<synchronous>, transform_indices = @transform_3, window_bounds = array<i64: 10, 10>}, {pipeline_mode = #tpu.pipeline_mode<synchronous>, transform_indices = @transform_4, window_bounds = array<i64: 10, 1>}, {pipeline_mode = #tpu.pipeline_mode<synchronous>, transform_indices = @transform_5, window_bounds = array<i64: 1, 10>}, {pipeline_mode = #tpu.pipeline_mode<synchronous>, transform_indices = @transform_6, window_bounds = array<i64: 1, 1>}, {transform_indices = @transform_7, window_bounds = array<i64: 1, 128>}]} {
    %c0 = arith.constant 0 : index
    %c0_0 = arith.constant 0 : index
    %0 = vector.load %arg1[%c0, %c0_0] : memref<128x14xf32, #tpu.memory_space<vmem>>, vector<128x14xf32>
    %c0_1 = arith.constant 0 : index
    %c0_2 = arith.constant 0 : index
    %1 = vector.load %arg2[%c0_1, %c0_2] : memref<10x14xf32, #tpu.memory_space<vmem>>, vector<10x14xf32>
    %cst = arith.constant dense<0.000000e+00> : vector<10x128xf32>
    %2 = tpu.matmul %1, %0, %cst {dimension_numbers = #tpu.dot_dimension_numbers<[1], [1], [0], [0], [0, 0, 1, 0], [], []>} : vector<10x14xf32>, vector<128x14xf32>, vector<10x128xf32> -> vector<10x128xf32>
    %c0_3 = arith.constant 0 : index
    %c0_4 = arith.constant 0 : index
    %3 = vector.load %arg3[%c0_3, %c0_4] : memref<10x1xf32, #tpu.memory_space<vmem>>, vector<10x1xf32>
    %4 = vector.broadcast %3 : vector<10x1xf32> to vector<10x128xf32>
    %5 = arith.addf %2, %4 : vector<10x128xf32>
    %cst_5 = arith.constant 0.000000e+00 : f32
    %6 = vector.broadcast %cst_5 : f32 to vector<10x128xf32>
    %7 = arith.maximumf %5, %6 : vector<10x128xf32>
    %c0_6 = arith.constant 0 : index
    %c0_7 = arith.constant 0 : index
    %8 = vector.load %arg4[%c0_6, %c0_7] : memref<10x10xf32, #tpu.memory_space<vmem>>, vector<10x10xf32>
    %cst_8 = arith.constant dense<0.000000e+00> : vector<10x128xf32>
    %9 = tpu.matmul %8, %7, %cst_8 {dimension_numbers = #tpu.dot_dimension_numbers<[1], [0], [0], [1], [0, 0, 1, 1], [], []>} : vector<10x10xf32>, vector<10x128xf32>, vector<10x128xf32> -> vector<10x128xf32>
    %c0_9 = arith.constant 0 : index
    %c0_10 = arith.constant 0 : index
    %10 = vector.load %arg5[%c0_9, %c0_10] : memref<10x1xf32, #tpu.memory_space<vmem>>, vector<10x1xf32>
    %11 = vector.broadcast %10 : vector<10x1xf32> to vector<10x128xf32>
    %12 = arith.addf %9, %11 : vector<10x128xf32>
    %cst_11 = arith.constant 0.000000e+00 : f32
    %13 = vector.broadcast %cst_11 : f32 to vector<10x128xf32>
    %14 = arith.maximumf %12, %13 : vector<10x128xf32>
    %c0_12 = arith.constant 0 : index
    %c0_13 = arith.constant 0 : index
    %15 = vector.load %arg6[%c0_12, %c0_13] : memref<1x10xf32, #tpu.memory_space<vmem>>, vector<1x10xf32>
    %cst_14 = arith.constant dense<0.000000e+00> : vector<1x128xf32>
    %16 = tpu.matmul %15, %14, %cst_14 {dimension_numbers = #tpu.dot_dimension_numbers<[1], [0], [0], [1], [0, 0, 1, 1], [], []>} : vector<1x10xf32>, vector<10x128xf32>, vector<1x128xf32> -> vector<1x128xf32>
    %c0_15 = arith.constant 0 : index
    %c0_16 = arith.constant 0 : index
    %17 = vector.load %arg7[%c0_15, %c0_16] : memref<1x1xf32, #tpu.memory_space<vmem>>, vector<1x1xf32>
    %18 = vector.broadcast %17 : vector<1x1xf32> to vector<1x128xf32>
    %19 = arith.addf %16, %18 : vector<1x128xf32>
    %c0_17 = arith.constant 0 : index
    %c0_18 = arith.constant 0 : index
    %20 = vector.load %arg8[%c0_17, %c0_18] : memref<1x128xf32, #tpu.memory_space<vmem>>, vector<1x128xf32>
    tpu.vector_store %arg8[%c0_17, %c0_18], %19 {strides = array<i32>} : memref<1x128xf32, #tpu.memory_space<vmem>>, vector<1x128xf32>,
    return
  }
  func.func @transform_0(%arg0: i32) -> (i32, i32) {
    %c0_i32 = arith.constant 0 : i32
    %c0_i32_0 = arith.constant 0 : i32
    return %arg0, %c0_i32 : i32, i32
  }
  func.func @transform_1(%arg0: i32) -> (i32, i32) {
    %c0_i32 = arith.constant 0 : i32
    %c0_i32_0 = arith.constant 0 : i32
    %c0_i32_1 = arith.constant 0 : i32
    return %c0_i32, %c0_i32_0 : i32, i32
  }
  func.func @transform_2(%arg0: i32) -> (i32, i32) {
    %c0_i32 = arith.constant 0 : i32
    %c0_i32_0 = arith.constant 0 : i32
    %c0_i32_1 = arith.constant 0 : i32
    return %c0_i32, %c0_i32_0 : i32, i32
  }
  func.func @transform_3(%arg0: i32) -> (i32, i32) {
    %c0_i32 = arith.constant 0 : i32
    %c0_i32_0 = arith.constant 0 : i32
    %c0_i32_1 = arith.constant 0 : i32
    return %c0_i32, %c0_i32_0 : i32, i32
  }
  func.func @transform_4(%arg0: i32) -> (i32, i32) {
    %c0_i32 = arith.constant 0 : i32
    %c0_i32_0 = arith.constant 0 : i32
    %c0_i32_1 = arith.constant 0 : i32
    return %c0_i32, %c0_i32_0 : i32, i32
  }
  func.func @transform_5(%arg0: i32) -> (i32, i32) {
    %c0_i32 = arith.constant 0 : i32
    %c0_i32_0 = arith.constant 0 : i32
    %c0_i32_1 = arith.constant 0 : i32
    return %c0_i32, %c0_i32_0 : i32, i32
  }
  func.func @transform_6(%arg0: i32) -> (i32, i32) {
    %c0_i32 = arith.constant 0 : i32
    %c0_i32_0 = arith.constant 0 : i32
    %c0_i32_1 = arith.constant 0 : i32
    return %c0_i32, %c0_i32_0 : i32, i32
  }
  func.func @transform_7(%arg0: i32) -> (i32, i32) {
    %c0_i32 = arith.constant 0 : i32
    %c0_i32_0 = arith.constant 0 : i32
    return %c0_i32, %arg0 : i32, i32
  }
}

</mosaic_0001>

<llo_original>
// kernel: tpu_custom_call.1
$region0: #{tpu_custom_call.1}
  #allocation0 [shape = 'u32[]', space=smem, size = 0x4, offset = 0x4, fixed_abs, tag = 'smem constant byte address 0x4 - core index']
  #allocation1 [shape = 'u32[144,128]{1,0:T(1,128)}', space=vmem, size = 0x12000, scoped, tag = 'internal scratch']
  #allocation2 [shape = 'f32[1,1]{1,0:T(1,128)S(1)}', space=vmem, size = 0x200, scoped, tag = 'scoped memory for tpu_custom_call.1']
  %s0 = inlined_call_operand.vmem [shape: f32[200,14], index: 0, kind: input, shape index: {}]
  %s1 = inlined_call_operand.vmem [shape: f32[10,14], index: 1, kind: input, shape index: {}]
  %s2 = inlined_call_operand.vmem [shape: f32[10,1], index: 2, kind: input, shape index: {}]
  %s3 = inlined_call_operand.vmem [shape: f32[10,10], index: 3, kind: input, shape index: {}]
  %s4 = inlined_call_operand.vmem [shape: f32[10,1], index: 4, kind: input, shape index: {}]
  %s5 = inlined_call_operand.vmem [shape: f32[1,10], index: 5, kind: input, shape index: {}]
  %s6 = inlined_call_operand.<no memory space> [shape: f32[1,1], index: 6, kind: input, shape index: {}]
  %s7 = inlined_call_operand.hbm [shape: f32[1,256], index: 7, kind: output, shape index: {}]
  %s8 = sld [smem:[#allocation0]]
  $region61: #{tpu_custom_call.1} parent=0
    _
  %s10 = ssub.s32 1, %s8
  %s11 = scalar_select 0, %s10, %s8
  %v12 = vstv %s6
  %13 = vst [vmem:[#allocation2] sm:$0x1] %v12
  $region1: #{tpu_custom_call.1} parent=0
    #allocation3 [shape = 'u8[1024]{0}', space=vmem, size = 0x400, scoped, tag = 'output window, operand 0']
    #allocation4 [shape = 's32[2]{0}', space=sflag, size = 0x8, scoped, tag = 'scoped memory for tpu_custom_call.1']
    %14 = vsyncpa [#allocation4], 0
    %s15 = scalar_lea.sflag [#allocation4], 1
    %16 = vsyncpa %s15, 0
    loop: start=0, step=1, limit=4
    $region2: #{tpu_custom_call.1} parent=1 // loop_pre_header
      _
    $region3: #{tpu_custom_call.1} parent=1 // loop_header
      %s18 = sphi 0, %s22
      %p19 = scmp.ge.s32.totalorder %s18, 4
      %s28 = sphi 0, %s30
      %s31 = sphi 0, %s28
      %s32 = sphi 0, %s31
      %s48 = sphi 0, %s32
      %s52 = sphi 0, %s52
      %s54 = sphi 0, %s52
      %s55 = sphi 0, %s54
      %s69 = sphi 0, %s55
      %s73 = sphi 0, %s73
      %s75 = sphi 0, %s73
      %s76 = sphi 0, %s75
      %s90 = sphi 0, %s76
      %s94 = sphi 0, %s94
      %s96 = sphi 0, %s94
      %s97 = sphi 0, %s96
      %s111 = sphi 0, %s97
      %s115 = sphi 0, %s115
      %s117 = sphi 0, %s115
      %s118 = sphi 0, %s117
      %s132 = sphi 0, %s118
      %s136 = sphi 0, %s136
      %s138 = sphi 0, %s136
      %s139 = sphi 0, %s138
      %s153 = sphi 0, %s139
      %s157 = sphi 0, %s157
      %s159 = sphi 0, %s157
      %s160 = sphi 0, %s159
      %s174 = sphi 0, %s160
      %s180 = sphi 0, %s182
      %s183 = sphi 0, %s180
      %s184 = sphi 0, %s183
      %s200 = sphi 0, %s184
    $region4: #{tpu_custom_call.1} parent=1 // loop_header_branch
      %21 = sbr.rel (%p19) target = $region8
    $region5: #{tpu_custom_call.1} parent=1 // loop_body
      %s23 = ssub.s32 %s18, 1
      %s24 = ssub.s32 %s18, 2
      %s25 = sadd.s32 %s18, 1
      %s26 = ssub.s32 %s18, %s25
      %p27 = scmp.eq.s32.totalorder %s26, 0
      %s29 = sadd.s32 %s28, 1
      %s30 = scalar_select %p27, %s28, %s29
      %p33 = pneg %p27
      %p34 = scmp.eq.s32.totalorder %s18, 1
      %p35 = por %p33, %p34
      %p36 = scmp.ne.s32.totalorder %s28, %s31
      %p37 = scmp.eq.s32.totalorder %s18, 0
      %p38 = por %p36, %p37
      %p39 = scmp.ne.s32.totalorder %s28, %s31
      %p40 = scmp.eq.s32.totalorder %s23, 1
      %p41 = por %p39, %p40
      %p42 = scmp.ne.s32.totalorder %s31, %s32
      %p43 = scmp.eq.s32.totalorder %s23, 0
      %p44 = por %p42, %p43
      %p45 = scmp.ne.s32.totalorder %s31, %s32
      %p46 = scmp.eq.s32.totalorder %s24, 1
      %p47 = por %p45, %p46
      %p49 = scmp.ne.s32.totalorder %s32, %s48
      %p50 = scmp.eq.s32.totalorder %s24, 0
      %p51 = por %p49, %p50
      %s53 = sadd.s32 %s52, 1
      %p56 = scmp.eq.s32.totalorder %s18, 1
      %p57 = scmp.ne.s32.totalorder %s52, %s54
      %p58 = scmp.eq.s32.totalorder %s18, 0
      %p59 = por %p57, %p58
      %p60 = scmp.ne.s32.totalorder %s52, %s54
      %p61 = scmp.eq.s32.totalorder %s23, 1
      %p62 = por %p60, %p61
      %p63 = scmp.ne.s32.totalorder %s54, %s55
      %p64 = scmp.eq.s32.totalorder %s23, 0
      %p65 = por %p63, %p64
      %p66 = scmp.ne.s32.totalorder %s54, %s55
      %p67 = scmp.eq.s32.totalorder %s24, 1
      %p68 = por %p66, %p67
      %p70 = scmp.ne.s32.totalorder %s55, %s69
      %p71 = scmp.eq.s32.totalorder %s24, 0
      %p72 = por %p70, %p71
      %s74 = sadd.s32 %s73, 1
      %p77 = scmp.eq.s32.totalorder %s18, 1
      %p78 = scmp.ne.s32.totalorder %s73, %s75
      %p79 = scmp.eq.s32.totalorder %s18, 0
      %p80 = por %p78, %p79
      %p81 = scmp.ne.s32.totalorder %s73, %s75
      %p82 = scmp.eq.s32.totalorder %s23, 1
      %p83 = por %p81, %p82
      %p84 = scmp.ne.s32.totalorder %s75, %s76
      %p85 = scmp.eq.s32.totalorder %s23, 0
      %p86 = por %p84, %p85
      %p87 = scmp.ne.s32.totalorder %s75, %s76
      %p88 = scmp.eq.s32.totalorder %s24, 1
      %p89 = por %p87, %p88
      %p91 = scmp.ne.s32.totalorder %s76, %s90
      %p92 = scmp.eq.s32.totalorder %s24, 0
      %p93 = por %p91, %p92
      %s95 = sadd.s32 %s94, 1
      %p98 = scmp.eq.s32.totalorder %s18, 1
      %p99 = scmp.ne.s32.totalorder %s94, %s96
      %p100 = scmp.eq.s32.totalorder %s18, 0
      %p101 = por %p99, %p100
      %p102 = scmp.ne.s32.totalorder %s94, %s96
      %p103 = scmp.eq.s32.totalorder %s23, 1
      %p104 = por %p102, %p103
      %p105 = scmp.ne.s32.totalorder %s96, %s97
      %p106 = scmp.eq.s32.totalorder %s23, 0
      %p107 = por %p105, %p106
      %p108 = scmp.ne.s32.totalorder %s96, %s97
      %p109 = scmp.eq.s32.totalorder %s24, 1
      %p110 = por %p108, %p109
      %p112 = scmp.ne.s32.totalorder %s97, %s111
      %p113 = scmp.eq.s32.totalorder %s24, 0
      %p114 = por %p112, %p113
      %s116 = sadd.s32 %s115, 1
      %p119 = scmp.eq.s32.totalorder %s18, 1
      %p120 = scmp.ne.s32.totalorder %s115, %s117
      %p121 = scmp.eq.s32.totalorder %s18, 0
      %p122 = por %p120, %p121
      %p123 = scmp.ne.s32.totalorder %s115, %s117
      %p124 = scmp.eq.s32.totalorder %s23, 1
      %p125 = por %p123, %p124
      %p126 = scmp.ne.s32.totalorder %s117, %s118
      %p127 = scmp.eq.s32.totalorder %s23, 0
      %p128 = por %p126, %p127
      %p129 = scmp.ne.s32.totalorder %s117, %s118
      %p130 = scmp.eq.s32.totalorder %s24, 1
      %p131 = por %p129, %p130
      %p133 = scmp.ne.s32.totalorder %s118, %s132
      %p134 = scmp.eq.s32.totalorder %s24, 0
      %p135 = por %p133, %p134
      %s137 = sadd.s32 %s136, 1
      %p140 = scmp.eq.s32.totalorder %s18, 1
      %p141 = scmp.ne.s32.totalorder %s136, %s138
      %p142 = scmp.eq.s32.totalorder %s18, 0
      %p143 = por %p141, %p142
      %p144 = scmp.ne.s32.totalorder %s136, %s138
      %p145 = scmp.eq.s32.totalorder %s23, 1
      %p146 = por %p144, %p145
      %p147 = scmp.ne.s32.totalorder %s138, %s139
      %p148 = scmp.eq.s32.totalorder %s23, 0
      %p149 = por %p147, %p148
      %p150 = scmp.ne.s32.totalorder %s138, %s139
      %p151 = scmp.eq.s32.totalorder %s24, 1
      %p152 = por %p150, %p151
      %p154 = scmp.ne.s32.totalorder %s139, %s153
      %p155 = scmp.eq.s32.totalorder %s24, 0
      %p156 = por %p154, %p155
      %s158 = sadd.s32 %s157, 1
      %p161 = scmp.eq.s32.totalorder %s18, 1
      %p162 = scmp.ne.s32.totalorder %s157, %s159
      %p163 = scmp.eq.s32.totalorder %s18, 0
      %p164 = por %p162, %p163
      %p165 = scmp.ne.s32.totalorder %s157, %s159
      %p166 = scmp.eq.s32.totalorder %s23, 1
      %p167 = por %p165, %p166
      %p168 = scmp.ne.s32.totalorder %s159, %s160
      %p169 = scmp.eq.s32.totalorder %s23, 0
      %p170 = por %p168, %p169
      %p171 = scmp.ne.s32.totalorder %s159, %s160
      %p172 = scmp.eq.s32.totalorder %s24, 1
      %p173 = por %p171, %p172
      %p175 = scmp.ne.s32.totalorder %s160, %s174
      %p176 = scmp.eq.s32.totalorder %s24, 0
      %p177 = por %p175, %p176
      %s178 = ssub.s32 %s18, %s25
      %p179 = scmp.eq.s32.totalorder %s178, 0
      %s181 = sadd.s32 %s180, 1
      %s182 = scalar_select %p179, %s180, %s181
      %p185 = pneg %p179
      %p186 = scmp.eq.s32.totalorder %s18, 1
      %p187 = por %p185, %p186
      %p188 = scmp.ne.s32.totalorder %s180, %s183
      %p189 = scmp.eq.s32.totalorder %s18, 0
      %p190 = por %p188, %p189
      %p191 = scmp.ne.s32.totalorder %s180, %s183
      %p192 = scmp.eq.s32.totalorder %s23, 1
      %p193 = por %p191, %p192
      %p194 = scmp.ne.s32.totalorder %s183, %s184
      %p195 = scmp.eq.s32.totalorder %s23, 0
      %p196 = por %p194, %p195
      %p197 = scmp.ne.s32.totalorder %s183, %s184
      %p198 = scmp.eq.s32.totalorder %s24, 1
      %p199 = por %p197, %p198
      %p201 = scmp.ne.s32.totalorder %s184, %s200
      %p202 = scmp.eq.s32.totalorder %s24, 0
      %p203 = por %p201, %p202
      %p204 = scmp.le.s32.totalorder 1, %s18
      %p205 = scmp.lt.s32.totalorder %s18, 3
      %p206 = pnand %p204, %p205
      %p207 = pneg %p206
      // Predicated region
      $region9: #{tpu_custom_call.1} parent=5 // pred_check
        _
      $region10: #{tpu_custom_call.1} parent=5 // pred_check_branch
        %209 = sbr.rel (%p206) target = $region12
      $region11: #{tpu_custom_call.1} parent=5 // pred_region
        %s210 = ssub.s32 %s18, 1
        // Predicated region
        $region13: #{tpu_custom_call.1} parent=11 // pred_check
          %p211 = pneg %p65
        $region14: #{tpu_custom_call.1} parent=11 // pred_check_branch
          %213 = sbr.rel (%p211) target = $region16
        $region15: #{tpu_custom_call.1} parent=11 // pred_region
          _
        $region16: #{tpu_custom_call.1} parent=11 // pred_fallthru
          _
        // Predicated region
        $region17: #{tpu_custom_call.1} parent=11 // pred_check
          %p214 = pneg %p86
        $region18: #{tpu_custom_call.1} parent=11 // pred_check_branch
          %216 = sbr.rel (%p214) target = $region20
        $region19: #{tpu_custom_call.1} parent=11 // pred_region
          _
        $region20: #{tpu_custom_call.1} parent=11 // pred_fallthru
          _
        // Predicated region
        $region21: #{tpu_custom_call.1} parent=11 // pred_check
          %p217 = pneg %p107
        $region22: #{tpu_custom_call.1} parent=11 // pred_check_branch
          %219 = sbr.rel (%p217) target = $region24
        $region23: #{tpu_custom_call.1} parent=11 // pred_region
          _
        $region24: #{tpu_custom_call.1} parent=11 // pred_fallthru
          _
        // Predicated region
        $region25: #{tpu_custom_call.1} parent=11 // pred_check
          %p220 = pneg %p128
        $region26: #{tpu_custom_call.1} parent=11 // pred_check_branch
          %222 = sbr.rel (%p220) target = $region28
        $region27: #{tpu_custom_call.1} parent=11 // pred_region
          _
        $region28: #{tpu_custom_call.1} parent=11 // pred_fallthru
          _
        // Predicated region
        $region29: #{tpu_custom_call.1} parent=11 // pred_check
          %p223 = pneg %p149
        $region30: #{tpu_custom_call.1} parent=11 // pred_check_branch
          %225 = sbr.rel (%p223) target = $region32
        $region31: #{tpu_custom_call.1} parent=11 // pred_region
          _
        $region32: #{tpu_custom_call.1} parent=11 // pred_fallthru
          _
        // Predicated region
        $region33: #{tpu_custom_call.1} parent=11 // pred_check
          %p226 = pneg %p170
        $region34: #{tpu_custom_call.1} parent=11 // pred_check_branch
          %228 = sbr.rel (%p226) target = $region36
        $region35: #{tpu_custom_call.1} parent=11 // pred_region
          _
        $region36: #{tpu_custom_call.1} parent=11 // pred_fallthru
          _
      $region12: #{tpu_custom_call.1} parent=5 // pred_fallthru
        _
      %p229 = scmp.lt.s32.totalorder %s18, 2
      // Predicated region
      $region37: #{tpu_custom_call.1} parent=5 // pred_check
        %p230 = pneg %p229
      $region38: #{tpu_custom_call.1} parent=5 // pred_check_branch
        %232 = sbr.rel (%p230) target = $region40
      $region39: #{tpu_custom_call.1} parent=5 // pred_region
        // Predicated region
        $region41: #{tpu_custom_call.1} parent=39 // pred_check
          %p233 = pneg %p38
        $region42: #{tpu_custom_call.1} parent=39 // pred_check_branch
          %235 = sbr.rel (%p233) target = $region44
        $region43: #{tpu_custom_call.1} parent=39 // pred_region
          %s236 = smul.u32 16, %s18
          %s237 = ssub.s32 25, %s236
          %p238 = scmp.lt.s32.totalorder %s237, 16
          %s239 = scalar_select %p238, %s237, 16
          %s240 = smul.u32 128, %s239
          %p241 = scmp.lt.s32.totalorder %s236, 24
          %s242 = scalar_select %p241, %s236, 24
          %s243 = smul.addr %s242, 8
          %s244 = scalar_lea.vmem %s0, %s243
          %s245 = smul.u32 16, %s18
          %s246 = ssub.s32 25, %s245
          %p247 = scmp.lt.s32.totalorder %s246, 16
          %s248 = scalar_select %p247, %s246, 16
          %s249 = smul.u32 128, %s248
        $region44: #{tpu_custom_call.1} parent=39 // pred_fallthru
          _
      $region40: #{tpu_custom_call.1} parent=5 // pred_fallthru
        _
      %p250 = scmp.le.s32.totalorder 1, %s18
      %p251 = scmp.lt.s32.totalorder %s18, 3
      %p252 = pnand %p250, %p251
      %p253 = pneg %p252
      // Predicated region
      $region45: #{tpu_custom_call.1} parent=5 // pred_check
        _
      $region46: #{tpu_custom_call.1} parent=5 // pred_check_branch
        %255 = sbr.rel (%p252) target = $region48
      $region47: #{tpu_custom_call.1} parent=5 // pred_region
        %s256 = ssub.s32 %s18, 1
        %s257 = smul.u32 16, %s23
        %s258 = ssub.s32 25, %s257
        %p259 = scmp.lt.s32.totalorder %s258, 16
        %s260 = scalar_select %p259, %s258, 16
        %s261 = smul.u32 128, %s260
        %p262 = scmp.lt.s32.totalorder %s257, 24
        %s263 = scalar_select %p262, %s257, 24
        %s264 = smul.addr %s263, 8
        %s265 = scalar_lea.vmem %s0, %s264
        %p266 = pneg %p44
        %p267 = pneg %p41
        %p268 = pneg %p65
        %p269 = pneg %p62
        %p270 = pneg %p86
        %p271 = pneg %p83
        %p272 = pneg %p107
        %p273 = pneg %p104
        %p274 = pneg %p128
        %p275 = pneg %p125
        %p276 = pneg %p149
        %p277 = pneg %p146
        %p278 = pneg %p170
        %p279 = pneg %p167
        %p280 = pneg %p196
        %p281 = pneg %p193
        %s282 = sand.u32 %s183, 1
        %s283 = scalar_lea.sflag [#allocation4], %s282
        %s284 = sand.u32 %s183, 1
        %s285 = scalar_lea.vmem [#allocation3], %s284
        %s286 = smul.u32 16, %s23
        %s287 = ssub.s32 25, %s286
        %p288 = scmp.lt.s32.totalorder %s287, 16
        %s289 = scalar_select %p288, %s287, 16
        %s290 = smul.u32 128, %s289
        %p291 = scmp.lt.s32.totalorder %s286, 24
        %s292 = scalar_select %p291, %s286, 24
        %s293 = smul.addr %s292, 8
        %s294 = scalar_lea.vmem %s0, %s293
        %s295 = smul.u32 16, %s23
        %s296 = ssub.s32 25, %s295
        %p297 = scmp.lt.s32.totalorder %s296, 16
        %s298 = scalar_select %p297, %s296, 16
        %s299 = smul.u32 128, %s298
        %v300 = vld [vmem:[%s294] sm:$0xff]
        %v301 = vld [vmem:[%s294 + $0x8] sm:$0xff]
        %v302 = vld [vmem:[%s294 + $0x10] sm:$0xff]
        %v303 = vld [vmem:[%s294 + $0x18] sm:$0xff]
        %v304 = vld [vmem:[%s294 + $0x20] sm:$0xff]
        %v305 = vld [vmem:[%s294 + $0x28] sm:$0xff]
        %v306 = vld [vmem:[%s294 + $0x30] sm:$0xff]
        %v307 = vld [vmem:[%s294 + $0x38] sm:$0xff]
        %v308 = vld [vmem:[%s294 + $0x40] sm:$0xff]
        %v309 = vld [vmem:[%s294 + $0x48] sm:$0xff]
        %v310 = vld [vmem:[%s294 + $0x50] sm:$0xff]
        %v311 = vld [vmem:[%s294 + $0x58] sm:$0xff]
        %v312 = vld [vmem:[%s294 + $0x60] sm:$0xff]
        %v313 = vld [vmem:[%s294 + $0x68] sm:$0xff]
        %v314 = vld [vmem:[%s294 + $0x70] sm:$0xff]
        %v315 = vld [vmem:[%s294 + $0x78] sm:$0xff]
        %v316 = vld [vmem:[%s1] sm:$0xff]
        %v317 = vld [vmem:[%s1 + $0x8] sm:$0x3]
        %v318 = vld [vmem:[%s2] sm:$0xff]
        %v319 = vld [vmem:[%s2 + $0x8] sm:$0x3]
        %321 = vset.pattern.permute.xlu0 0
        %322 = vperm.xlu0 %321, %v318
        %v323 = vpop.permute.xlu0 %322
        %326 = vset.pattern.permute.xlu0 0
        %327 = vperm.xlu0 %326, %v319
        %v328 = vpop.permute.xlu0 %327
        %vm330 = vcmask 113664
        %v332 = vsel %vm330, %v316, 0
        %v335 = vsel %vm330, %v317, 0
        %v338 = vsel %vm330, %v300, 0
        %v341 = vsel %vm330, %v301, 0
        %v344 = vsel %vm330, %v302, 0
        %v347 = vsel %vm330, %v303, 0
        %v350 = vsel %vm330, %v304, 0
        %v353 = vsel %vm330, %v305, 0
        %v356 = vsel %vm330, %v306, 0
        %v359 = vsel %vm330, %v307, 0
        %v362 = vsel %vm330, %v308, 0
        %v365 = vsel %vm330, %v309, 0
        %v368 = vsel %vm330, %v310, 0
        %v371 = vsel %vm330, %v311, 0
        %v374 = vsel %vm330, %v312, 0
        %v377 = vsel %vm330, %v313, 0
        %v380 = vsel %vm330, %v314, 0
        %v383 = vsel %vm330, %v315, 0
        %385 = vmatprep.subr.mxu0 0.0
        %386 = vmatpush1.xpose.msra.mxu0 %v383
        %387 = vmatprep.subr.mxu0 0.0
        %388 = vmatpush1.xpose.msra.mxu0 %v380
        %389 = vmatprep.subr.mxu0 0.0
        %390 = vmatpush1.xpose.msra.mxu0 %v377
        %391 = vmatprep.subr.mxu0 0.0
        %392 = vmatpush1.xpose.msra.mxu0 %v374
        %393 = vmatprep.subr.mxu0 0.0
        %394 = vmatpush1.xpose.msra.mxu0 %v371
        %395 = vmatprep.subr.mxu0 0.0
        %396 = vmatpush1.xpose.msra.mxu0 %v368
        %397 = vmatprep.subr.mxu0 0.0
        %398 = vmatpush1.xpose.msra.mxu0 %v365
        %399 = vmatprep.subr.mxu0 0.0
        %400 = vmatpush1.xpose.msra.mxu0 %v362
        %401 = vmatprep.subr.mxu0 0.0
        %402 = vmatpush1.xpose.msra.mxu0 %v359
        %403 = vmatprep.subr.mxu0 0.0
        %404 = vmatpush1.xpose.msra.mxu0 %v356
        %405 = vmatprep.subr.mxu0 0.0
        %406 = vmatpush1.xpose.msra.mxu0 %v353
        %407 = vmatprep.subr.mxu0 0.0
        %408 = vmatpush1.xpose.msra.mxu0 %v350
        %409 = vmatprep.subr.mxu0 0.0
        %410 = vmatpush1.xpose.msra.mxu0 %v347
        %411 = vmatprep.subr.mxu0 0.0
        %412 = vmatpush1.xpose.msra.mxu0 %v344
        %413 = vmatprep.subr.mxu0 0.0
        %414 = vmatpush1.xpose.msra.mxu0 %v341
        %415 = vmatprep.subr.mxu0 0.0
        %416 = vmatpush1.xpose.msra.mxu0 %v338
        %417 = vmatprep.subr.mxu0 0.0
        %418 = vmatpush2.xpose.msra.mxu0 0.0
        %419 = vmatprep.subr.mxu0 0.0
        %420 = vmatpush2.xpose.msra.mxu0 0.0
        %421 = vmatprep.subr.mxu0 0.0
        %422 = vmatpush2.xpose.msra.mxu0 0.0
        %423 = vmatprep.subr.mxu0 0.0
        %424 = vmatpush2.xpose.msra.mxu0 0.0
        %425 = vmatprep.subr.mxu0 0.0
        %426 = vmatpush2.xpose.msra.mxu0 0.0
        %427 = vmatprep.subr.mxu0 0.0
        %428 = vmatpush2.xpose.msra.mxu0 0.0
        %429 = vmatprep.subr.mxu0 0.0
        %430 = vmatpush2.xpose.msra.mxu0 0.0
        %431 = vmatprep.subr.mxu0 0.0
        %432 = vmatpush2.xpose.msra.mxu0 0.0
        %433 = vmatprep.subr.mxu0 0.0
        %434 = vmatpush2.xpose.msra.mxu0 0.0
        %435 = vmatprep.subr.mxu0 0.0
        %436 = vmatpush2.xpose.msra.mxu0 0.0
        %437 = vmatprep.subr.mxu0 0.0
        %438 = vmatpush2.xpose.msra.mxu0 0.0
        %439 = vmatprep.subr.mxu0 0.0
        %440 = vmatpush2.xpose.msra.mxu0 0.0
        %441 = vmatprep.subr.mxu0 0.0
        %442 = vmatpush2.xpose.msra.mxu0 0.0
        %443 = vmatprep.subr.mxu0 0.0
        %444 = vmatpush2.xpose.msra.mxu0 0.0
        %445 = vmatprep.subr.mxu0 0.0
        %446 = vmatpush2.xpose.msra.mxu0 0.0
        %447 = vmatprep.subr.mxu0 0.0
        %448 = vmatpush2.xpose.msra.mxu0 0.0
        %449 = vmatprep.mubr.f32.mxu0 0.0
        %450 = vmatmul.mubr.f32.gmra.mxu0 %v332
        %v451 = vpop.f32.mrf.mxu0
        %v452 = vadd.f32 %v323, %v451
        %v453 = vpop.f32.mrf.mxu0
        %454 = vmatprep.mubr.f32.mxu0 0.0
        %455 = vmatmul.mubr.f32.gmra.mxu0 %v335
        %v456 = vpop.f32.mrf.mxu0
        %v457 = vadd.f32 %v328, %v456
        %v458 = vpop.f32.mrf.mxu0
        %459 = vdwg.mxu0
        %v460 = vmax.f32 %v452, 0.0
        %v461 = vmax.f32 %v457, 0.0
        %v462 = vld [vmem:[%s3] sm:$0xff]
        %v463 = vld [vmem:[%s3 + $0x8] sm:$0x3]
        %v464 = vld [vmem:[%s4] sm:$0xff]
        %v465 = vld [vmem:[%s4 + $0x8] sm:$0x3]
        %467 = vset.pattern.permute.xlu0 0
        %468 = vperm.xlu0 %467, %v464
        %v469 = vpop.permute.xlu0 %468
        %472 = vset.pattern.permute.xlu0 0
        %473 = vperm.xlu0 %472, %v465
        %v474 = vpop.permute.xlu0 %473
        %vm476 = vcmask 80896
        %v478 = vsel %vm476, %v462, 0
        %v481 = vsel %vm476, %v463, 0
        %vm483 = vcmask 1041408
        %v485 = vsel %vm483, %v461, 0
        %487 = vmatprep.subr.mxu0 0.0
        %488 = vmatpush1.msra.mxu0 0.0
        %489 = vmatprep.subr.mxu0 0.0
        %490 = vmatpush1.msra.mxu0 0.0
        %491 = vmatprep.subr.mxu0 0.0
        %492 = vmatpush1.msra.mxu0 0.0
        %493 = vmatprep.subr.mxu0 0.0
        %494 = vmatpush1.msra.mxu0 0.0
        %495 = vmatprep.subr.mxu0 0.0
        %496 = vmatpush1.msra.mxu0 0.0
        %497 = vmatprep.subr.mxu0 0.0
        %498 = vmatpush1.msra.mxu0 0.0
        %499 = vmatprep.subr.mxu0 0.0
        %500 = vmatpush1.msra.mxu0 0.0
        %501 = vmatprep.subr.mxu0 0.0
        %502 = vmatpush1.msra.mxu0 0.0
        %503 = vmatprep.subr.mxu0 0.0
        %504 = vmatpush1.msra.mxu0 0.0
        %505 = vmatprep.subr.mxu0 0.0
        %506 = vmatpush1.msra.mxu0 0.0
        %507 = vmatprep.subr.mxu0 0.0
        %508 = vmatpush1.msra.mxu0 0.0
        %509 = vmatprep.subr.mxu0 0.0
        %510 = vmatpush1.msra.mxu0 0.0
        %511 = vmatprep.subr.mxu0 0.0
        %512 = vmatpush1.msra.mxu0 0.0
        %513 = vmatprep.subr.mxu0 0.0
        %514 = vmatpush1.msra.mxu0 0.0
        %515 = vmatprep.subr.mxu0 0.0
        %516 = vmatpush1.msra.mxu0 %v485
        %517 = vmatprep.subr.mxu0 0.0
        %518 = vmatpush1.msra.mxu0 %v460
        %519 = vmatprep.subr.mxu0 0.0
        %520 = vmatpush2.msra.mxu0 0.0
        %521 = vmatprep.subr.mxu0 0.0
        %522 = vmatpush2.msra.mxu0 0.0
        %523 = vmatprep.subr.mxu0 0.0
        %524 = vmatpush2.msra.mxu0 0.0
        %525 = vmatprep.subr.mxu0 0.0
        %526 = vmatpush2.msra.mxu0 0.0
        %527 = vmatprep.subr.mxu0 0.0
        %528 = vmatpush2.msra.mxu0 0.0
        %529 = vmatprep.subr.mxu0 0.0
        %530 = vmatpush2.msra.mxu0 0.0
        %531 = vmatprep.subr.mxu0 0.0
        %532 = vmatpush2.msra.mxu0 0.0
        %533 = vmatprep.subr.mxu0 0.0
        %534 = vmatpush2.msra.mxu0 0.0
        %535 = vmatprep.subr.mxu0 0.0
        %536 = vmatpush2.msra.mxu0 0.0
        %537 = vmatprep.subr.mxu0 0.0
        %538 = vmatpush2.msra.mxu0 0.0
        %539 = vmatprep.subr.mxu0 0.0
        %540 = vmatpush2.msra.mxu0 0.0
        %541 = vmatprep.subr.mxu0 0.0
        %542 = vmatpush2.msra.mxu0 0.0
        %543 = vmatprep.subr.mxu0 0.0
        %544 = vmatpush2.msra.mxu0 0.0
        %545 = vmatprep.subr.mxu0 0.0
        %546 = vmatpush2.msra.mxu0 0.0
        %547 = vmatprep.subr.mxu0 0.0
        %548 = vmatpush2.msra.mxu0 0.0
        %549 = vmatprep.subr.mxu0 0.0
        %550 = vmatpush2.msra.mxu0 0.0
        %551 = vmatprep.mubr.f32.mxu0 0.0
        %552 = vmatmul.mubr.f32.gmra.mxu0 %v478
        %v553 = vpop.f32.mrf.mxu0
        %v554 = vadd.f32 %v469, %v553
        %v555 = vpop.f32.mrf.mxu0
        %556 = vmatprep.mubr.f32.mxu0 0.0
        %557 = vmatmul.mubr.f32.gmra.mxu0 %v481
        %v558 = vpop.f32.mrf.mxu0
        %v559 = vadd.f32 %v474, %v558
        %v560 = vpop.f32.mrf.mxu0
        %561 = vdwg.mxu0
        %v562 = vmax.f32 %v554, 0.0
        %v563 = vmax.f32 %v559, 0.0
        %v564 = vld [vmem:[%s5] sm:$0x1]
        %v565 = vld [vmem:[#allocation2] sm:$0x1]
        %567 = vset.pattern.permute.xlu0 0
        %568 = vperm.xlu0 %567, %v565
        %v569 = vpop.permute.xlu0 %568
        %v571 = vlaneseq
        %v572 = vshrl.u32 %v571, 7
        %v573 = vsub.s32 0, %v572
        %v574 = vrot.slane %v569, %v573
        %v576 = vsel %vm476, %v564, 0
        %v579 = vsel %vm483, %v563, 0
        %581 = vmatprep.subr.mxu0 0.0
        %582 = vmatpush1.msra.mxu0 0.0
        %583 = vmatprep.subr.mxu0 0.0
        %584 = vmatpush1.msra.mxu0 0.0
        %585 = vmatprep.subr.mxu0 0.0
        %586 = vmatpush1.msra.mxu0 0.0
        %587 = vmatprep.subr.mxu0 0.0
        %588 = vmatpush1.msra.mxu0 0.0
        %589 = vmatprep.subr.mxu0 0.0
        %590 = vmatpush1.msra.mxu0 0.0
        %591 = vmatprep.subr.mxu0 0.0
        %592 = vmatpush1.msra.mxu0 0.0
        %593 = vmatprep.subr.mxu0 0.0
        %594 = vmatpush1.msra.mxu0 0.0
        %595 = vmatprep.subr.mxu0 0.0
        %596 = vmatpush1.msra.mxu0 0.0
        %597 = vmatprep.subr.mxu0 0.0
        %598 = vmatpush1.msra.mxu0 0.0
        %599 = vmatprep.subr.mxu0 0.0
        %600 = vmatpush1.msra.mxu0 0.0
        %601 = vmatprep.subr.mxu0 0.0
        %602 = vmatpush1.msra.mxu0 0.0
        %603 = vmatprep.subr.mxu0 0.0
        %604 = vmatpush1.msra.mxu0 0.0
        %605 = vmatprep.subr.mxu0 0.0
        %606 = vmatpush1.msra.mxu0 0.0
        %607 = vmatprep.subr.mxu0 0.0
        %608 = vmatpush1.msra.mxu0 0.0
        %609 = vmatprep.subr.mxu0 0.0
        %610 = vmatpush1.msra.mxu0 %v579
        %611 = vmatprep.subr.mxu0 0.0
        %612 = vmatpush1.msra.mxu0 %v562
        %613 = vmatprep.subr.mxu0 0.0
        %614 = vmatpush2.msra.mxu0 0.0
        %615 = vmatprep.subr.mxu0 0.0
        %616 = vmatpush2.msra.mxu0 0.0
        %617 = vmatprep.subr.mxu0 0.0
        %618 = vmatpush2.msra.mxu0 0.0
        %619 = vmatprep.subr.mxu0 0.0
        %620 = vmatpush2.msra.mxu0 0.0
        %621 = vmatprep.subr.mxu0 0.0
        %622 = vmatpush2.msra.mxu0 0.0
        %623 = vmatprep.subr.mxu0 0.0
        %624 = vmatpush2.msra.mxu0 0.0
        %625 = vmatprep.subr.mxu0 0.0
        %626 = vmatpush2.msra.mxu0 0.0
        %627 = vmatprep.subr.mxu0 0.0
        %628 = vmatpush2.msra.mxu0 0.0
        %629 = vmatprep.subr.mxu0 0.0
        %630 = vmatpush2.msra.mxu0 0.0
        %631 = vmatprep.subr.mxu0 0.0
        %632 = vmatpush2.msra.mxu0 0.0
        %633 = vmatprep.subr.mxu0 0.0
        %634 = vmatpush2.msra.mxu0 0.0
        %635 = vmatprep.subr.mxu0 0.0
        %636 = vmatpush2.msra.mxu0 0.0
        %637 = vmatprep.subr.mxu0 0.0
        %638 = vmatpush2.msra.mxu0 0.0
        %639 = vmatprep.subr.mxu0 0.0
        %640 = vmatpush2.msra.mxu0 0.0
        %641 = vmatprep.subr.mxu0 0.0
        %642 = vmatpush2.msra.mxu0 0.0
        %643 = vmatprep.subr.mxu0 0.0
        %644 = vmatpush2.msra.mxu0 0.0
        %645 = vmatprep.mubr.f32.mxu0 0.0
        %646 = vmatmul.mubr.f32.gmra.mxu0 %v576
        %v647 = vpop.f32.mrf.mxu0
        %v648 = vadd.f32 %v574, %v647
        %v649 = vpop.f32.mrf.mxu0
        %650 = vdwg.mxu0
        %651 = vst [vmem:[%s285] sm:$0x1] %v648
        %s652 = sand.u32 %s183, 1
        %s653 = scalar_lea.sflag [#allocation4], %s652
        %s654 = sand.u32 %s183, 1
        %s655 = scalar_lea.vmem [#allocation3], %s654
        // Predicated region
        $region49: #{tpu_custom_call.1} parent=47 // pred_check
          %p656 = pneg %p193
        $region50: #{tpu_custom_call.1} parent=47 // pred_check_branch
          %658 = sbr.rel (%p656) target = $region52
        $region51: #{tpu_custom_call.1} parent=47 // pred_region
          %s660 = ssub.s32 16, 16
          %661 = vsyncadd %s653, %s660
          %s662 = smul.addr %s23, 16
          %s663 = scalar_lea.hbm %s7, %s662
          %s665 = sshll.u32 %s655, 4
          %s666 = int_to_ptr.vmem [resolvable:$true] %s665
          %668 = dma.vmem_to_hbm [thread:$0]  %s666, 16, %s663, %s653
        $region52: #{tpu_custom_call.1} parent=47 // pred_fallthru
          _
      $region48: #{tpu_custom_call.1} parent=5 // pred_fallthru
        _
      %p669 = scmp.le.s32.totalorder 2, %s18
      // Predicated region
      $region53: #{tpu_custom_call.1} parent=5 // pred_check
        %p670 = pneg %p669
      $region54: #{tpu_custom_call.1} parent=5 // pred_check_branch
        %672 = sbr.rel (%p670) target = $region56
      $region55: #{tpu_custom_call.1} parent=5 // pred_region
        %s673 = ssub.s32 %s18, 2
        // Predicated region
        $region57: #{tpu_custom_call.1} parent=55 // pred_check
          %p674 = pneg %p199
        $region58: #{tpu_custom_call.1} parent=55 // pred_check_branch
          %676 = sbr.rel (%p674) target = $region60
        $region59: #{tpu_custom_call.1} parent=55 // pred_region
          %s677 = sand.u32 %s184, 1
          %s678 = scalar_lea.sflag [#allocation4], %s677
          %s679 = sand.u32 %s184, 1
          %s680 = scalar_lea.vmem [#allocation3], %s679
          %681 = dma.done %s678, 16
        $region60: #{tpu_custom_call.1} parent=55 // pred_fallthru
          _
      $region56: #{tpu_custom_call.1} parent=5 // pred_fallthru
        _
    $region6: #{tpu_custom_call.1} parent=1 // loop_footer
      %s22 = sadd.s32 1, %s18
    $region7: #{tpu_custom_call.1} parent=1 // loop_footer_branch
      %17 = sbr.rel target = $region3
    $region8: #{tpu_custom_call.1} parent=1 // loop_exit
      _
    %682 = vsyncpa [#allocation4], 1
    %s683 = scalar_lea.sflag [#allocation4], 1
    %684 = vsyncpa %s683, 1

</llo_original>
